<compile_context>
chip_gen: v5e
topology: v5e:2x2
jax: 0.10.0
libtpu: 0.0.40
codegen_flags: <defaults>
</compile_context>

<pallas_src>
import jax
import jax.numpy as jnp
from jax.experimental import pallas as pl
from jax.experimental.pallas import tpu as pltpu

LANE = 128  # TPU lane width; batch tiles and the hidden dim are padded to this.


def _valuefn_kernel(x_ref, w1_ref, b1_ref, w2_ref, b2_ref, w3_ref, b3_ref, o_ref):
    # x_ref:  (TB, NI)  f32 (cast to bf16 in-kernel)
    # w1_ref: (NI, Hp)  bf16     b1_ref: (1, Hp) f32
    # w2_ref: (Hp, Hp)  bf16     b2_ref: (1, Hp) f32
    # w3_ref: (1, Hp)   f32 (head weight as a row vector)
    # b3_ref: (1, 1)    f32 in SMEM (scalar)
    # o_ref:  (1, TB)   f32 (lane-dense output row for this batch tile)

    # In-kernel bf16 cast (VPU, hidden under the x DMA) -> MXU bf16 fast path
    # with f32 accumulation.  K = num_inputs (unpadded); MXU has huge slack.
    x = x_ref[...].astype(w1_ref.dtype)
    h1 = jnp.dot(x, w1_ref[...], preferred_element_type=jnp.float32)
    h1 = jnp.maximum(h1 + b1_ref[...], 0.0)

    # Layer 2: cast activation back to bf16 for the MXU; accumulate in f32.
    h2 = jnp.dot(h1.astype(w2_ref.dtype), w2_ref[...],
                 preferred_element_type=jnp.float32)
    h2 = jnp.maximum(h2 + b2_ref[...], 0.0)

    # Head (out_features == 1): VPU multiply + lane reduction instead of an
    # N=1 MXU matmul, stored lane-dense as (1, TB).
    v = jnp.sum(h2 * w3_ref[...], axis=-1)               # (TB,)
    o_ref[...] = (v[None, :] + b3_ref[0, 0]).astype(o_ref.dtype)


def _pad2(a, shape):
    return jnp.pad(a, [(0, t - s) for s, t in zip(a.shape, shape)])


def value_fn_forward(x, params, *, compute_dtype=jnp.bfloat16):
    """x: (B, num_inputs) f32.  params: dict of w1,b1,w2,b2,w3,b3.  Returns (B, 1) f32."""
    B, num_inputs = x.shape
    hidden = params["w1"].shape[1]
    Hp = pl.cdiv(hidden, LANE) * LANE

    # Batch tile: multiple of 128, large enough to amortize the ~0.35 us/step
    # grid overhead, capped at 4096 (double-buffered tiles stay a few MiB even
    # within v7x's 64 MiB VMEM), and chosen so G >= 2 when the batch allows it
    # so the "parallel" axis actually feeds both v7x TensorCores.
    B128 = pl.cdiv(B, LANE) * LANE
    TB = min(4096, max(LANE, (B128 // 2 // LANE) * LANE))
    Bp = pl.cdiv(B, TB) * TB
    G = Bp // TB

    # x stays f32 and feature-unpadded (block last dim == full array dim);
    # only the batch is zero-padded, and only when B % TB != 0.
    xin = x if Bp == B else jnp.pad(x, ((0, Bp - B), (0, 0)))

    # Weights are tiny and resident: pad hidden to 128 lanes once (numerically
    # inert: zero biases in padded lanes, ReLU(0)=0, zero w3 lanes), cast the
    # matmul weights to bf16.  Biases / head math stay f32.
    w1p = _pad2(params["w1"], (num_inputs, Hp)).astype(compute_dtype)
    w2p = _pad2(params["w2"], (Hp, Hp)).astype(compute_dtype)
    b1p = _pad2(params["b1"].reshape(1, -1), (1, Hp)).astype(jnp.float32)
    b2p = _pad2(params["b2"].reshape(1, -1), (1, Hp)).astype(jnp.float32)
    w3p = _pad2(params["w3"].reshape(1, -1), (1, Hp)).astype(jnp.float32)
    b3p = params["b3"].reshape(1, 1).astype(jnp.float32)

    out = pl.pallas_call(
        _valuefn_kernel,
        out_shape=jax.ShapeDtypeStruct((1, Bp), jnp.float32),
        grid_spec=pltpu.PrefetchScalarGridSpec(
            num_scalar_prefetch=0,
            grid=(G,),
            in_specs=[
                pl.BlockSpec((TB, num_inputs), lambda i: (i, 0)),   # x: batch-tiled, unpadded K
                pl.BlockSpec((num_inputs, Hp), lambda i: (0, 0)),   # w1: resident
                pl.BlockSpec((1, Hp), lambda i: (0, 0)),            # b1: resident
                pl.BlockSpec((Hp, Hp), lambda i: (0, 0)),           # w2: resident
                pl.BlockSpec((1, Hp), lambda i: (0, 0)),            # b2: resident
                pl.BlockSpec((1, Hp), lambda i: (0, 0)),            # w3 row: resident
                pl.BlockSpec(memory_space=pltpu.MemorySpace.SMEM),  # b3 scalar in SMEM
            ],
            out_specs=pl.BlockSpec((1, TB), lambda i: (0, i)),      # lane-contiguous row
        ),
        compiler_params=pltpu.CompilerParams(
            dimension_semantics=("parallel",),          # v7x: shard batch over both TCs
            vmem_limit_bytes=32 * 1024 * 1024,          # safe on v5e/v6e/v7x at TB<=4096
        ),
    )(xin, w1p, b1p, w2p, b2p, w3p, b3p)

    # (1, Bp) -> (Bp, 1) -> drop batch padding (free reshape).
    return out.reshape(Bp, 1)[:B]


def init_params(key, num_inputs, hidden_size):
    """Deterministic synthetic init.
    # TODO(synk): torch init_relu/init_ use orthogonal init; scaled-normal stand-in
    # here (forward-pass semantics are unaffected).
    """
    k1, k2, k3 = jax.random.split(key, 3)
    w1 = jax.random.normal(k1, (num_inputs, hidden_size), jnp.float32) * (
        jnp.sqrt(2.0) / jnp.sqrt(num_inputs)
    )
    w2 = jax.random.normal(k2, (hidden_size, hidden_size), jnp.float32) * (
        jnp.sqrt(2.0) / jnp.sqrt(hidden_size)
    )
    w3 = jax.random.normal(k3, (hidden_size, 1), jnp.float32) * (
        1.0 / jnp.sqrt(hidden_size)
    )
    return {
        "w1": w1, "b1": jnp.zeros((hidden_size,), jnp.float32),
        "w2": w2, "b2": jnp.zeros((hidden_size,), jnp.float32),
        "w3": w3, "b3": jnp.zeros((1,), jnp.float32),
    }


def value_fn_reference(x, params, compute_dtype=jnp.bfloat16):
    """Pure-JAX reference with the same bf16 rounding of MXU inputs (f32 math)."""
    r = lambda a: a.astype(compute_dtype).astype(jnp.float32)
    h1 = jnp.maximum(r(x) @ r(params["w1"]) + params["b1"].reshape(1, -1), 0.0)
    h2 = jnp.maximum(r(h1) @ r(params["w2"]) + params["b2"].reshape(1, -1), 0.0)
    return h2 @ params["w3"] + params["b3"].reshape(1, 1)


if __name__ == "__main__":
    key = jax.random.PRNGKey(0)
    kx, kx2, kp = jax.random.split(key, 3)

    batch, num_inputs, hidden_size = 8, 32, 64
    x = jax.random.normal(kx, (batch, num_inputs), jnp.float32)
    params = init_params(kp, num_inputs, hidden_size)

    out = value_fn_forward(x, params)
    jax.block_until_ready(out)
    ref = value_fn_reference(x, params)
    assert out.shape == (batch, 1), out.shape
    assert jnp.allclose(out, ref, atol=1e-2, rtol=1e-2), "mismatch vs reference (small)"

    # Second check: batch not a multiple of the tile -> exercises batch padding
    # and the multi-grid-step (G > 1) path.
    batch2 = 300
    x2 = jax.random.normal(kx2, (batch2, num_inputs), jnp.float32)
    out2 = value_fn_forward(x2, params)
    jax.block_until_ready(out2)
    ref2 = value_fn_reference(x2, params)
    assert out2.shape == (batch2, 1), out2.shape
    assert jnp.allclose(out2, ref2, atol=1e-2, rtol=1e-2), "mismatch vs reference (tiled)"

    print("KERNEL_OK")
</pallas_src>

<mosaic_0001>
module attributes {stable_mosaic.version = 11 : i64} {
  func.func @_valuefn_kernel(%arg0: i32, %arg1: memref<128x32xf32, #tpu.memory_space<vmem>>, %arg2: memref<32x128xbf16, #tpu.memory_space<vmem>>, %arg3: memref<1x128xf32, #tpu.memory_space<vmem>>, %arg4: memref<128x128xbf16, #tpu.memory_space<vmem>>, %arg5: memref<1x128xf32, #tpu.memory_space<vmem>>, %arg6: memref<1x128xf32, #tpu.memory_space<vmem>>, %arg7: memref<1x1xf32, #tpu.memory_space<smem>>, %arg8: memref<1x128xf32, #tpu.memory_space<vmem>>) attributes {dimension_semantics = [#tpu.dimension_semantics<parallel>], iteration_bounds = array<i64: 1>, scalar_prefetch = 0 : i64, scratch_operands = 0 : i64, tpu.core_type = #tpu.core_type<tc>, window_params = [{transform_indices = @transform_0, window_bounds = array<i64: 128, 32>}, {pipeline_mode = #tpu.pipeline_mode<synchronous>, transform_indices = @transform_1, window_bounds = array<i64: 32, 128>}, {pipeline_mode = #tpu.pipeline_mode<synchronous>, transform_indices = @transform_2, window_bounds = array<i64: 1, 128>}, {pipeline_mode = #tpu.pipeline_mode<synchronous>, transform_indices = @transform_3, window_bounds = array<i64: 128, 128>}, {pipeline_mode = #tpu.pipeline_mode<synchronous>, transform_indices = @transform_4, window_bounds = array<i64: 1, 128>}, {pipeline_mode = #tpu.pipeline_mode<synchronous>, transform_indices = @transform_5, window_bounds = array<i64: 1, 128>}, {transform_indices = @transform_6, window_bounds = array<i64: 1, 1>}, {transform_indices = @transform_7, window_bounds = array<i64: 1, 128>}]} {
    %c0 = arith.constant 0 : index
    %c0_0 = arith.constant 0 : index
    %0 = vector.load %arg1[%c0, %c0_0] : memref<128x32xf32, #tpu.memory_space<vmem>>, vector<128x32xf32>
    %1 = arith.truncf %0 : vector<128x32xf32> to vector<128x32xbf16>
    %c0_1 = arith.constant 0 : index
    %c0_2 = arith.constant 0 : index
    %2 = vector.load %arg2[%c0_1, %c0_2] : memref<32x128xbf16, #tpu.memory_space<vmem>>, vector<32x128xbf16>
    %cst = arith.constant dense<0.000000e+00> : vector<128x128xf32>
    %3 = tpu.matmul %1, %2, %cst {dimension_numbers = #tpu.dot_dimension_numbers<[1], [0], [0], [1], [0, 0, 1, 1], [], []>} : vector<128x32xbf16>, vector<32x128xbf16>, vector<128x128xf32> -> vector<128x128xf32>
    %c0_3 = arith.constant 0 : index
    %c0_4 = arith.constant 0 : index
    %4 = vector.load %arg3[%c0_3, %c0_4] : memref<1x128xf32, #tpu.memory_space<vmem>>, vector<1x128xf32>
    %5 = vector.broadcast %4 : vector<1x128xf32> to vector<128x128xf32>
    %6 = arith.addf %3, %5 : vector<128x128xf32>
    %cst_5 = arith.constant 0.000000e+00 : f32
    %7 = vector.broadcast %cst_5 : f32 to vector<128x128xf32>
    %8 = arith.maximumf %6, %7 : vector<128x128xf32>
    %9 = arith.truncf %8 : vector<128x128xf32> to vector<128x128xbf16>
    %c0_6 = arith.constant 0 : index
    %c0_7 = arith.constant 0 : index
    %10 = vector.load %arg4[%c0_6, %c0_7] : memref<128x128xbf16, #tpu.memory_space<vmem>>, vector<128x128xbf16>
    %cst_8 = arith.constant dense<0.000000e+00> : vector<128x128xf32>
    %11 = tpu.matmul %9, %10, %cst_8 {dimension_numbers = #tpu.dot_dimension_numbers<[1], [0], [0], [1], [0, 0, 1, 1], [], []>} : vector<128x128xbf16>, vector<128x128xbf16>, vector<128x128xf32> -> vector<128x128xf32>
    %c0_9 = arith.constant 0 : index
    %c0_10 = arith.constant 0 : index
    %12 = vector.load %arg5[%c0_9, %c0_10] : memref<1x128xf32, #tpu.memory_space<vmem>>, vector<1x128xf32>
    %13 = vector.broadcast %12 : vector<1x128xf32> to vector<128x128xf32>
    %14 = arith.addf %11, %13 : vector<128x128xf32>
    %cst_11 = arith.constant 0.000000e+00 : f32
    %15 = vector.broadcast %cst_11 : f32 to vector<128x128xf32>
    %16 = arith.maximumf %14, %15 : vector<128x128xf32>
    %c0_12 = arith.constant 0 : index
    %c0_13 = arith.constant 0 : index
    %17 = vector.load %arg6[%c0_12, %c0_13] : memref<1x128xf32, #tpu.memory_space<vmem>>, vector<1x128xf32>
    %18 = vector.broadcast %17 : vector<1x128xf32> to vector<128x128xf32>
    %19 = arith.mulf %16, %18 : vector<128x128xf32>
    %cst_14 = arith.constant dense<0.000000e+00> : vector<128xf32>
    %20 = vector.multi_reduction <add>, %19, %cst_14 [1] : vector<128x128xf32> to vector<128xf32>
    %21 = vector.shape_cast %20 : vector<128xf32> to vector<1x128xf32>
    %c0_15 = arith.constant 0 : index
    %c0_16 = arith.constant 0 : index
    %22 = memref.load %arg7[%c0_15, %c0_16] : memref<1x1xf32, #tpu.memory_space<smem>>
    %23 = vector.broadcast %22 : f32 to vector<1x128xf32>
    %24 = arith.addf %21, %23 : vector<1x128xf32>
    %c0_17 = arith.constant 0 : index
    %c0_18 = arith.constant 0 : index
    %25 = vector.load %arg8[%c0_17, %c0_18] : memref<1x128xf32, #tpu.memory_space<vmem>>, vector<1x128xf32>
    tpu.vector_store %arg8[%c0_17, %c0_18], %24 {strides = array<i32>} : memref<1x128xf32, #tpu.memory_space<vmem>>, vector<1x128xf32>,
    return
  }
  func.func @transform_0(%arg0: i32) -> (i32, i32) {
    %c0_i32 = arith.constant 0 : i32
    %c0_i32_0 = arith.constant 0 : i32
    return %arg0, %c0_i32 : i32, i32
  }
  func.func @transform_1(%arg0: i32) -> (i32, i32) {
    %c0_i32 = arith.constant 0 : i32
    %c0_i32_0 = arith.constant 0 : i32
    %c0_i32_1 = arith.constant 0 : i32
    return %c0_i32, %c0_i32_0 : i32, i32
  }
  func.func @transform_2(%arg0: i32) -> (i32, i32) {
    %c0_i32 = arith.constant 0 : i32
    %c0_i32_0 = arith.constant 0 : i32
    %c0_i32_1 = arith.constant 0 : i32
    return %c0_i32, %c0_i32_0 : i32, i32
  }
  func.func @transform_3(%arg0: i32) -> (i32, i32) {
    %c0_i32 = arith.constant 0 : i32
    %c0_i32_0 = arith.constant 0 : i32
    %c0_i32_1 = arith.constant 0 : i32
    return %c0_i32, %c0_i32_0 : i32, i32
  }
  func.func @transform_4(%arg0: i32) -> (i32, i32) {
    %c0_i32 = arith.constant 0 : i32
    %c0_i32_0 = arith.constant 0 : i32
    %c0_i32_1 = arith.constant 0 : i32
    return %c0_i32, %c0_i32_0 : i32, i32
  }
  func.func @transform_5(%arg0: i32) -> (i32, i32) {
    %c0_i32 = arith.constant 0 : i32
    %c0_i32_0 = arith.constant 0 : i32
    %c0_i32_1 = arith.constant 0 : i32
    return %c0_i32, %c0_i32_0 : i32, i32
  }
  func.func @transform_6(%arg0: i32) -> (i32, i32) {
    %c0_i32 = arith.constant 0 : i32
    %c0_i32_0 = arith.constant 0 : i32
    %c0_i32_1 = arith.constant 0 : i32
    return %c0_i32, %c0_i32_0 : i32, i32
  }
  func.func @transform_7(%arg0: i32) -> (i32, i32) {
    %c0_i32 = arith.constant 0 : i32
    %c0_i32_0 = arith.constant 0 : i32
    return %c0_i32, %arg0 : i32, i32
  }
}

</mosaic_0001>

<llo_original>
// kernel: tpu_custom_call.1
$region0: #{tpu_custom_call.1}
  #allocation0 [shape = 'u32[]', space=smem, size = 0x4, offset = 0x4, fixed_abs, tag = 'smem constant byte address 0x4 - core index']
  #allocation1 [shape = 'u32[72,128]{1,0:T(1,128)}', space=vmem, size = 0x9000, scoped, tag = 'internal scratch']
  #allocation2 [shape = 'f32[1,1]{1,0:T(1,128)S(6)}', space=smem, size = 0x200, scoped, tag = 'scoped memory for tpu_custom_call.1']
  %s0 = inlined_call_operand.vmem [shape: f32[128,32], index: 0, kind: input, shape index: {}]
  %s1 = inlined_call_operand.vmem [shape: bf16[32,128], index: 1, kind: input, shape index: {}]
  %s2 = inlined_call_operand.vmem [shape: f32[1,128], index: 2, kind: input, shape index: {}]
  %s3 = inlined_call_operand.vmem [shape: bf16[128,128], index: 3, kind: input, shape index: {}]
  %s4 = inlined_call_operand.vmem [shape: f32[1,128], index: 4, kind: input, shape index: {}]
  %s5 = inlined_call_operand.vmem [shape: f32[1,128], index: 5, kind: input, shape index: {}]
  %s6 = inlined_call_operand.<no memory space> [shape: f32[1,1], index: 6, kind: input, shape index: {}]
  %s7 = inlined_call_operand.hbm [shape: f32[1,128], index: 7, kind: output, shape index: {}]
  %s8 = sld [smem:[#allocation0]]
  $region38: #{tpu_custom_call.1} parent=0
    _
  %s10 = ssub.s32 1, %s8
  %s11 = scalar_select 0, %s10, %s8
  %12 = sst [smem:[#allocation2]] %s6
  $region1: #{tpu_custom_call.1} parent=0
    #allocation3 [shape = 'u8[512]{0}', space=vmem, size = 0x400, scoped, tag = 'output window, operand 0, single buffered']
    #allocation4 [shape = 's32[1]{0}', space=sflag, size = 0x4, scoped, tag = 'scoped memory for tpu_custom_call.1']
    %13 = vsyncpa [#allocation4], 0
    // Predicated region
    $region2: #{tpu_custom_call.1} parent=1 // pred_check
      _
    $region3: #{tpu_custom_call.1} parent=1 // pred_check_branch
      %15 = sbr.rel (0) target = $region5
    $region4: #{tpu_custom_call.1} parent=1 // pred_region
      _
    $region5: #{tpu_custom_call.1} parent=1 // pred_fallthru
      _
    // Predicated region
    $region6: #{tpu_custom_call.1} parent=1 // pred_check
      _
    $region7: #{tpu_custom_call.1} parent=1 // pred_check_branch
      %17 = sbr.rel (0) target = $region9
    $region8: #{tpu_custom_call.1} parent=1 // pred_region
      _
    $region9: #{tpu_custom_call.1} parent=1 // pred_fallthru
      _
    // Predicated region
    $region10: #{tpu_custom_call.1} parent=1 // pred_check
      _
    $region11: #{tpu_custom_call.1} parent=1 // pred_check_branch
      %19 = sbr.rel (0) target = $region13
    $region12: #{tpu_custom_call.1} parent=1 // pred_region
      _
    $region13: #{tpu_custom_call.1} parent=1 // pred_fallthru
      _
    // Predicated region
    $region14: #{tpu_custom_call.1} parent=1 // pred_check
      _
    $region15: #{tpu_custom_call.1} parent=1 // pred_check_branch
      %21 = sbr.rel (0) target = $region17
    $region16: #{tpu_custom_call.1} parent=1 // pred_region
      _
    $region17: #{tpu_custom_call.1} parent=1 // pred_fallthru
      _
    // Predicated region
    $region18: #{tpu_custom_call.1} parent=1 // pred_check
      _
    $region19: #{tpu_custom_call.1} parent=1 // pred_check_branch
      %23 = sbr.rel (0) target = $region21
    $region20: #{tpu_custom_call.1} parent=1 // pred_region
      _
    $region21: #{tpu_custom_call.1} parent=1 // pred_fallthru
      _
    // Predicated region
    $region22: #{tpu_custom_call.1} parent=1 // pred_check
      _
    $region23: #{tpu_custom_call.1} parent=1 // pred_check_branch
      %25 = sbr.rel (0) target = $region25
    $region24: #{tpu_custom_call.1} parent=1 // pred_region
      _
    $region25: #{tpu_custom_call.1} parent=1 // pred_fallthru
      _
    // Predicated region
    $region26: #{tpu_custom_call.1} parent=1 // pred_check
      _
    $region27: #{tpu_custom_call.1} parent=1 // pred_check_branch
      %27 = sbr.rel (0) target = $region29
    $region28: #{tpu_custom_call.1} parent=1 // pred_region
      _
    $region29: #{tpu_custom_call.1} parent=1 // pred_fallthru
      _
    %v29 = vld [vmem:[%s0] sm:$0xff]
    %v30 = vld [vmem:[%s0 + $0x8] sm:$0xff]
    %v31 = vld [vmem:[%s0 + $0x10] sm:$0xff]
    %v32 = vld [vmem:[%s0 + $0x18] sm:$0xff]
    %v33 = vld [vmem:[%s0 + $0x20] sm:$0xff]
    %v34 = vld [vmem:[%s0 + $0x28] sm:$0xff]
    %v35 = vld [vmem:[%s0 + $0x30] sm:$0xff]
    %v36 = vld [vmem:[%s0 + $0x38] sm:$0xff]
    %v37 = vld [vmem:[%s0 + $0x40] sm:$0xff]
    %v38 = vld [vmem:[%s0 + $0x48] sm:$0xff]
    %v39 = vld [vmem:[%s0 + $0x50] sm:$0xff]
    %v40 = vld [vmem:[%s0 + $0x58] sm:$0xff]
    %v41 = vld [vmem:[%s0 + $0x60] sm:$0xff]
    %v42 = vld [vmem:[%s0 + $0x68] sm:$0xff]
    %v43 = vld [vmem:[%s0 + $0x70] sm:$0xff]
    %v44 = vld [vmem:[%s0 + $0x78] sm:$0xff]
    %v45 = vpack.c.bf16 %v30, %v29
    %v46 = vpack.c.bf16 %v32, %v31
    %v47 = vpack.c.bf16 %v34, %v33
    %v48 = vpack.c.bf16 %v36, %v35
    %v49 = vpack.c.bf16 %v38, %v37
    %v50 = vpack.c.bf16 %v40, %v39
    %v51 = vpack.c.bf16 %v42, %v41
    %v52 = vpack.c.bf16 %v44, %v43
    %v53 = vld [vmem:[%s1] sm:$0xf]
    %v54 = vld [vmem:[%s1 + $0x4] sm:$0xf]
    %v55 = vld [vmem:[%s1 + $0x8] sm:$0xf]
    %v56 = vld [vmem:[%s1 + $0xc] sm:$0xf]
    %v57 = vld [vmem:[%s2] sm:$0x1]
    %v59 = vperm.slane %v57, 0
    %v65 = vunpack.c.l.b16 %v53
    %v66 = vunpack.c.l.b16 %v54
    %v67 = vunpack.c.l.b16 %v55
    %v68 = vunpack.c.l.b16 %v56
    %v69 = vpack.c.b16 %v66, %v65
    %v70 = vpack.c.b16 %v68, %v67
    %vm73 = vcmask 261120
    %v75 = vsel %vm73, %v45, 0
    %v78 = vsel %vm73, %v46, 0
    %v81 = vsel %vm73, %v47, 0
    %v84 = vsel %vm73, %v48, 0
    %v87 = vsel %vm73, %v49, 0
    %v90 = vsel %vm73, %v50, 0
    %v93 = vsel %vm73, %v51, 0
    %v96 = vsel %vm73, %v52, 0
    %98 = vmatpush.bf16.msra.mxu0 0
    %99 = vmatpush.bf16.msra.mxu0 0
    %100 = vmatpush.bf16.msra.mxu0 0
    %101 = vmatpush.bf16.msra.mxu0 0
    %102 = vmatpush.bf16.msra.mxu0 0
    %103 = vmatpush.bf16.msra.mxu0 0
    %104 = vmatpush.bf16.msra.mxu0 %v70
    %105 = vmatpush.bf16.msra.mxu0 %v69
    %106 = vmatmul.bf16.gmra.mxu0 %v75
    %v107 = vpop.f32.mrf.mxu0
    %v108 = vadd.f32 %v59, %v107
    %v109 = vpop.f32.mrf.mxu0
    %v110 = vadd.f32 %v59, %v109
    %111 = vmatmul.bf16.gmra.mxu0 %v78
    %v112 = vpop.f32.mrf.mxu0
    %v113 = vadd.f32 %v59, %v112
    %v114 = vpop.f32.mrf.mxu0
    %v115 = vadd.f32 %v59, %v114
    %116 = vmatmul.bf16.gmra.mxu0 %v81
    %v117 = vpop.f32.mrf.mxu0
    %v118 = vadd.f32 %v59, %v117
    %v119 = vpop.f32.mrf.mxu0
    %v120 = vadd.f32 %v59, %v119
    %121 = vmatmul.bf16.gmra.mxu0 %v84
    %v122 = vpop.f32.mrf.mxu0
    %v123 = vadd.f32 %v59, %v122
    %v124 = vpop.f32.mrf.mxu0
    %v125 = vadd.f32 %v59, %v124
    %126 = vmatmul.bf16.gmra.mxu0 %v87
    %v127 = vpop.f32.mrf.mxu0
    %v128 = vadd.f32 %v59, %v127
    %v129 = vpop.f32.mrf.mxu0
    %v130 = vadd.f32 %v59, %v129
    %131 = vmatmul.bf16.gmra.mxu0 %v90
    %v132 = vpop.f32.mrf.mxu0
    %v133 = vadd.f32 %v59, %v132
    %v134 = vpop.f32.mrf.mxu0
    %v135 = vadd.f32 %v59, %v134
    %136 = vmatmul.bf16.gmra.mxu0 %v93
    %v137 = vpop.f32.mrf.mxu0
    %v138 = vadd.f32 %v59, %v137
    %v139 = vpop.f32.mrf.mxu0
    %v140 = vadd.f32 %v59, %v139
    %141 = vmatmul.bf16.gmra.mxu0 %v96
    %v142 = vpop.f32.mrf.mxu0
    %v143 = vadd.f32 %v59, %v142
    %v144 = vpop.f32.mrf.mxu0
    %v145 = vadd.f32 %v59, %v144
    %146 = vdwg.mxu0
    %v147 = vmax.f32 %v108, 0.0
    %v148 = vmax.f32 %v110, 0.0
    %v149 = vmax.f32 %v113, 0.0
    %v150 = vmax.f32 %v115, 0.0
    %v151 = vmax.f32 %v118, 0.0
    %v152 = vmax.f32 %v120, 0.0
    %v153 = vmax.f32 %v123, 0.0
    %v154 = vmax.f32 %v125, 0.0
    %v155 = vmax.f32 %v128, 0.0
    %v156 = vmax.f32 %v130, 0.0
    %v157 = vmax.f32 %v133, 0.0
    %v158 = vmax.f32 %v135, 0.0
    %v159 = vmax.f32 %v138, 0.0
    %v160 = vmax.f32 %v140, 0.0
    %v161 = vmax.f32 %v143, 0.0
    %v162 = vmax.f32 %v145, 0.0
    %v163 = vpack.c.bf16 %v148, %v147
    %v164 = vpack.c.bf16 %v150, %v149
    %v165 = vpack.c.bf16 %v152, %v151
    %v166 = vpack.c.bf16 %v154, %v153
    %v167 = vpack.c.bf16 %v156, %v155
    %v168 = vpack.c.bf16 %v158, %v157
    %v169 = vpack.c.bf16 %v160, %v159
    %v170 = vpack.c.bf16 %v162, %v161
    %v171 = vld [vmem:[%s3] sm:$0xf]
    %v172 = vld [vmem:[%s3 + $0x4] sm:$0xf]
    %v173 = vld [vmem:[%s3 + $0x8] sm:$0xf]
    %v174 = vld [vmem:[%s3 + $0xc] sm:$0xf]
    %v175 = vld [vmem:[%s3 + $0x10] sm:$0xf]
    %v176 = vld [vmem:[%s3 + $0x14] sm:$0xf]
    %v177 = vld [vmem:[%s3 + $0x18] sm:$0xf]
    %v178 = vld [vmem:[%s3 + $0x1c] sm:$0xf]
    %v179 = vld [vmem:[%s3 + $0x20] sm:$0xf]
    %v180 = vld [vmem:[%s3 + $0x24] sm:$0xf]
    %v181 = vld [vmem:[%s3 + $0x28] sm:$0xf]
    %v182 = vld [vmem:[%s3 + $0x2c] sm:$0xf]
    %v183 = vld [vmem:[%s3 + $0x30] sm:$0xf]
    %v184 = vld [vmem:[%s3 + $0x34] sm:$0xf]
    %v185 = vld [vmem:[%s3 + $0x38] sm:$0xf]
    %v186 = vld [vmem:[%s3 + $0x3c] sm:$0xf]
    %v187 = vld [vmem:[%s4] sm:$0x1]
    %v189 = vperm.slane %v187, 0
    %v207 = vunpack.c.l.b16 %v171
    %v208 = vunpack.c.l.b16 %v172
    %v209 = vunpack.c.l.b16 %v173
    %v210 = vunpack.c.l.b16 %v174
    %v211 = vunpack.c.l.b16 %v175
    %v212 = vunpack.c.l.b16 %v176
    %v213 = vunpack.c.l.b16 %v177
    %v214 = vunpack.c.l.b16 %v178
    %v215 = vunpack.c.l.b16 %v179
    %v216 = vunpack.c.l.b16 %v180
    %v217 = vunpack.c.l.b16 %v181
    %v218 = vunpack.c.l.b16 %v182
    %v219 = vunpack.c.l.b16 %v183
    %v220 = vunpack.c.l.b16 %v184
    %v221 = vunpack.c.l.b16 %v185
    %v222 = vunpack.c.l.b16 %v186
    %v223 = vpack.c.b16 %v208, %v207
    %v224 = vpack.c.b16 %v210, %v209
    %v225 = vpack.c.b16 %v212, %v211
    %v226 = vpack.c.b16 %v214, %v213
    %v227 = vpack.c.b16 %v216, %v215
    %v228 = vpack.c.b16 %v218, %v217
    %v229 = vpack.c.b16 %v220, %v219
    %v230 = vpack.c.b16 %v222, %v221
    %239 = vmatpush.bf16.msra.mxu0 %v230
    %240 = vmatpush.bf16.msra.mxu0 %v229
    %241 = vmatpush.bf16.msra.mxu0 %v228
    %242 = vmatpush.bf16.msra.mxu0 %v227
    %243 = vmatpush.bf16.msra.mxu0 %v226
    %244 = vmatpush.bf16.msra.mxu0 %v225
    %245 = vmatpush.bf16.msra.mxu0 %v224
    %246 = vmatpush.bf16.msra.mxu0 %v223
    %247 = vmatmul.bf16.gmra.mxu0 %v163
    %v248 = vpop.f32.mrf.mxu0
    %v249 = vadd.f32 %v189, %v248
    %v250 = vpop.f32.mrf.mxu0
    %v251 = vadd.f32 %v189, %v250
    %252 = vmatmul.bf16.gmra.mxu0 %v164
    %v253 = vpop.f32.mrf.mxu0
    %v254 = vadd.f32 %v189, %v253
    %v255 = vpop.f32.mrf.mxu0
    %v256 = vadd.f32 %v189, %v255
    %257 = vmatmul.bf16.gmra.mxu0 %v165
    %v258 = vpop.f32.mrf.mxu0
    %v259 = vadd.f32 %v189, %v258
    %v260 = vpop.f32.mrf.mxu0
    %v261 = vadd.f32 %v189, %v260
    %262 = vmatmul.bf16.gmra.mxu0 %v166
    %v263 = vpop.f32.mrf.mxu0
    %v264 = vadd.f32 %v189, %v263
    %v265 = vpop.f32.mrf.mxu0
    %v266 = vadd.f32 %v189, %v265
    %267 = vmatmul.bf16.gmra.mxu0 %v167
    %v268 = vpop.f32.mrf.mxu0
    %v269 = vadd.f32 %v189, %v268
    %v270 = vpop.f32.mrf.mxu0
    %v271 = vadd.f32 %v189, %v270
    %272 = vmatmul.bf16.gmra.mxu0 %v168
    %v273 = vpop.f32.mrf.mxu0
    %v274 = vadd.f32 %v189, %v273
    %v275 = vpop.f32.mrf.mxu0
    %v276 = vadd.f32 %v189, %v275
    %277 = vmatmul.bf16.gmra.mxu0 %v169
    %v278 = vpop.f32.mrf.mxu0
    %v279 = vadd.f32 %v189, %v278
    %v280 = vpop.f32.mrf.mxu0
    %v281 = vadd.f32 %v189, %v280
    %282 = vmatmul.bf16.gmra.mxu0 %v170
    %v283 = vpop.f32.mrf.mxu0
    %v284 = vadd.f32 %v189, %v283
    %v285 = vpop.f32.mrf.mxu0
    %v286 = vadd.f32 %v189, %v285
    %287 = vdwg.mxu0
    %v288 = vmax.f32 %v249, 0.0
    %v289 = vmax.f32 %v251, 0.0
    %v290 = vmax.f32 %v254, 0.0
    %v291 = vmax.f32 %v256, 0.0
    %v292 = vmax.f32 %v259, 0.0
    %v293 = vmax.f32 %v261, 0.0
    %v294 = vmax.f32 %v264, 0.0
    %v295 = vmax.f32 %v266, 0.0
    %v296 = vmax.f32 %v269, 0.0
    %v297 = vmax.f32 %v271, 0.0
    %v298 = vmax.f32 %v274, 0.0
    %v299 = vmax.f32 %v276, 0.0
    %v300 = vmax.f32 %v279, 0.0
    %v301 = vmax.f32 %v281, 0.0
    %v302 = vmax.f32 %v284, 0.0
    %v303 = vmax.f32 %v286, 0.0
    %v304 = vld [vmem:[%s5] sm:$0x1]
    %v306 = vperm.slane %v304, 0
    %v308 = vmul.f32 %v288, %v306
    %v309 = vmul.f32 %v289, %v306
    %v310 = vmul.f32 %v290, %v306
    %v311 = vmul.f32 %v291, %v306
    %v312 = vmul.f32 %v292, %v306
    %v313 = vmul.f32 %v293, %v306
    %v314 = vmul.f32 %v294, %v306
    %v315 = vmul.f32 %v295, %v306
    %v316 = vmul.f32 %v296, %v306
    %v317 = vmul.f32 %v297, %v306
    %v318 = vmul.f32 %v298, %v306
    %v319 = vmul.f32 %v299, %v306
    %v320 = vmul.f32 %v300, %v306
    %v321 = vmul.f32 %v301, %v306
    %v322 = vmul.f32 %v302, %v306
    %v323 = vmul.f32 %v303, %v306
    %324 = vadd.xlane.f32.xlu0 %v308
    %v325 = vpop.xlane.xlu0 %324
    %326 = vadd.xlane.f32.xlu0 %v309
    %v327 = vpop.xlane.xlu0 %326
    %328 = vadd.xlane.f32.xlu0 %v310
    %v329 = vpop.xlane.xlu0 %328
    %330 = vadd.xlane.f32.xlu0 %v311
    %v331 = vpop.xlane.xlu0 %330
    %332 = vadd.xlane.f32.xlu0 %v312
    %v333 = vpop.xlane.xlu0 %332
    %334 = vadd.xlane.f32.xlu0 %v313
    %v335 = vpop.xlane.xlu0 %334
    %336 = vadd.xlane.f32.xlu0 %v314
    %v337 = vpop.xlane.xlu0 %336
    %338 = vadd.xlane.f32.xlu0 %v315
    %v339 = vpop.xlane.xlu0 %338
    %340 = vadd.xlane.f32.xlu0 %v316
    %v341 = vpop.xlane.xlu0 %340
    %342 = vadd.xlane.f32.xlu0 %v317
    %v343 = vpop.xlane.xlu0 %342
    %344 = vadd.xlane.f32.xlu0 %v318
    %v345 = vpop.xlane.xlu0 %344
    %346 = vadd.xlane.f32.xlu0 %v319
    %v347 = vpop.xlane.xlu0 %346
    %348 = vadd.xlane.f32.xlu0 %v320
    %v349 = vpop.xlane.xlu0 %348
    %350 = vadd.xlane.f32.xlu0 %v321
    %v351 = vpop.xlane.xlu0 %350
    %352 = vadd.xlane.f32.xlu0 %v322
    %v353 = vpop.xlane.xlu0 %352
    %354 = vadd.xlane.f32.xlu0 %v323
    %v355 = vpop.xlane.xlu0 %354
    %s356 = sld [smem:[#allocation2]]
    %v357 = vstv %s356
    %v358 = vadd.f32 %v325, %v357
    %v359 = vadd.f32 %v327, %v357
    %v360 = vadd.f32 %v329, %v357
    %v361 = vadd.f32 %v331, %v357
    %v362 = vadd.f32 %v333, %v357
    %v363 = vadd.f32 %v335, %v357
    %v364 = vadd.f32 %v337, %v357
    %v365 = vadd.f32 %v339, %v357
    %v366 = vadd.f32 %v341, %v357
    %v367 = vadd.f32 %v343, %v357
    %v368 = vadd.f32 %v345, %v357
    %v369 = vadd.f32 %v347, %v357
    %v370 = vadd.f32 %v349, %v357
    %v371 = vadd.f32 %v351, %v357
    %v372 = vadd.f32 %v353, %v357
    %v373 = vadd.f32 %v355, %v357
    %v390 = vlaneseq
    %v391 = vand.u32 %v390, 127
    %v392 = vperm.slane %v358, %v391
    %v393 = vadd.s32 %v391, 4294967288
    %v394 = vperm.slane %v359, %v393
    %vm395 = vcmask 130112
    %v396 = vsel %vm395, %v394, %v392
    %v397 = vadd.s32 %v391, 4294967280
    %v398 = vperm.slane %v360, %v397
    %vm399 = vcmask 195712
    %v400 = vsel %vm399, %v398, %v396
    %v401 = vadd.s32 %v391, 4294967272
    %v402 = vperm.slane %v361, %v401
    %vm403 = vcmask 261312
    %v404 = vsel %vm403, %v402, %v400
    %v405 = vadd.s32 %v391, 4294967264
    %v406 = vperm.slane %v362, %v405
    %vm407 = vcmask 326912
    %v408 = vsel %vm407, %v406, %v404
    %v409 = vadd.s32 %v391, 4294967256
    %v410 = vperm.slane %v363, %v409
    %vm411 = vcmask 392512
    %v412 = vsel %vm411, %v410, %v408
    %v413 = vadd.s32 %v391, 4294967248
    %v414 = vperm.slane %v364, %v413
    %vm415 = vcmask 458112
    %v416 = vsel %vm415, %v414, %v412
    %v417 = vadd.s32 %v391, 4294967240
    %v418 = vperm.slane %v365, %v417
    %vm419 = vcmask 523712
    %v420 = vsel %vm419, %v418, %v416
    %v421 = vadd.s32 %v391, 4294967232
    %v422 = vperm.slane %v366, %v421
    %vm423 = vcmask 589312
    %v424 = vsel %vm423, %v422, %v420
    %v425 = vadd.s32 %v391, 4294967224
    %v426 = vperm.slane %v367, %v425
    %vm427 = vcmask 654912
    %v428 = vsel %vm427, %v426, %v424
    %v429 = vadd.s32 %v391, 4294967216
    %v430 = vperm.slane %v368, %v429
    %vm431 = vcmask 720512
    %v432 = vsel %vm431, %v430, %v428
    %v433 = vadd.s32 %v391, 4294967208
    %v434 = vperm.slane %v369, %v433
    %vm435 = vcmask 786112
    %v436 = vsel %vm435, %v434, %v432
    %v437 = vadd.s32 %v391, 4294967200
    %v438 = vperm.slane %v370, %v437
    %vm439 = vcmask 851712
    %v440 = vsel %vm439, %v438, %v436
    %v441 = vadd.s32 %v391, 4294967192
    %v442 = vperm.slane %v371, %v441
    %vm443 = vcmask 917312
    %v444 = vsel %vm443, %v442, %v440
    %v445 = vadd.s32 %v391, 4294967184
    %v446 = vperm.slane %v372, %v445
    %vm447 = vcmask 982912
    %v448 = vsel %vm447, %v446, %v444
    %v449 = vadd.s32 %v391, 4294967176
    %v450 = vperm.slane %v373, %v449
    %vm451 = vcmask 1048512
    %v452 = vsel %vm451, %v450, %v448
    %454 = vst [vmem:[#allocation3] sm:$0x1] %v452
    // Predicated region
    $region30: #{tpu_custom_call.1} parent=1 // pred_check
      _
    $region31: #{tpu_custom_call.1} parent=1 // pred_check_branch
      %456 = sbr.rel (0) target = $region33
    $region32: #{tpu_custom_call.1} parent=1 // pred_region
      %458 = vsyncadd [#allocation4], 0
      %s460 = sshll.u32 [#allocation3], 4
      %s461 = int_to_ptr.vmem [resolvable:$true] %s460
      %s462 = sshll.u32 %s7, 4
      %s463 = int_to_ptr.hbm [resolvable:$true] %s462
      %465 = dma.vmem_to_hbm [thread:$0]  %s461, 16, %s463, [#allocation4]
    $region33: #{tpu_custom_call.1} parent=1 // pred_fallthru
      _
    // Predicated region
    $region34: #{tpu_custom_call.1} parent=1 // pred_check
      _
    $region35: #{tpu_custom_call.1} parent=1 // pred_check_branch
      %467 = sbr.rel (0) target = $region37
    $region36: #{tpu_custom_call.1} parent=1 // pred_region
      %469 = dma.done [#allocation4], 16
    $region37: #{tpu_custom_call.1} parent=1 // pred_fallthru
      _
    %470 = vsyncpa [#allocation4], 1

</llo_original>
